<compile_context>
chip_gen: v5e
topology: v5e:2x2
jax: 0.10.0
libtpu: 0.0.40
codegen_flags: <defaults>
</compile_context>

<pallas_src>
import functools

import jax
import jax.numpy as jnp
import numpy as np
from jax.experimental import pallas as pl
from jax.experimental.pallas import tpu as pltpu


def _mean_pool_conv_kernel(x_ref, w_ref, b_ref, o_ref, pp_ref, *, K, pad, cin, bblk):
    # x_ref : (Bblk, H2, 2, W2, 2*Cin)  bf16  inputs for Bblk batch elements, laid
    #         out so the 2x2 pool window is (axis 2) x (halves of the last axis).
    # w_ref : (Cout, K*K*Cin)           bf16  im2col-folded conv weights (incl. 1/4).
    # b_ref : (Cout, 1)                 f32   bias.
    # o_ref : (Bblk, Cout, H2*W2)       f32   output, spatial on the lane axis.
    # pp_ref: (Bblk, H2+2p, W2+2p, Cin) bf16  scratch: zero-padded pooled images.
    H2, W2 = x_ref.shape[1], x_ref.shape[3]
    HW4 = H2 * W2
    Wp = pp_ref.shape[2]

    # ---- halo-only zeroing of the padded scratch (perimeter strips) ----------
    if pad > 0:
        zt = jnp.zeros((bblk, pad, Wp, cin), pp_ref.dtype)
        pp_ref[:, :pad] = zt                       # top rows
        pp_ref[:, pad + H2:] = zt                  # bottom rows
        zl = jnp.zeros((bblk, H2, pad, cin), pp_ref.dtype)
        pp_ref[:, pad:pad + H2, :pad] = zl         # left cols
        pp_ref[:, pad:pad + H2, pad + W2:] = zl    # right cols

    # ---- 2x2 sum pool (stride 2) on the VPU ----------------------------------
    # f32 adds (works on all generations incl. v5e), single cast to bf16 at the
    # scratch write.  The 1/4 scale is folded into w_ref.
    for b in range(bblk):
        xb = x_ref[b].astype(jnp.float32)          # (H2, 2, W2, 2*Cin)
        s = xb[:, 0] + xb[:, 1]                    # rows 2i + 2i+1   -> (H2, W2, 2*Cin)
        pooled = s[:, :, :cin] + s[:, :, cin:]     # cols 2j + 2j+1   -> (H2, W2, Cin)
        pp_ref[b, pad:pad + H2, pad:pad + W2, :] = pooled.astype(pp_ref.dtype)

    # ---- conv as ONE fused MXU matmul over all Bblk images --------------------
    pp = pp_ref[...]                               # (Bblk, Hp, Wp, Cin) bf16
    taps = [pp[:, kh:kh + H2, kw:kw + W2, :]       # K*K shifted VMEM views only
            for kh in range(K) for kw in range(K)]
    # NOTE: for tiny Cin the lane-axis concat underutilizes lanes (review item
    # on small channel counts); at production Cin (>=32) the taps are lane-dense.
    col = jnp.concatenate(taps, axis=-1)           # (Bblk, H2, W2, K*K*Cin) bf16
    col = col.reshape(bblk * HW4, K * K * cin)     # merge leading dims: free
    # (Cout, KKC) . (M, KKC)^T  ->  (Cout, M): result already has spatial on the
    # lane axis, so no transpose and no masked Cout-wide stores.
    acc = jnp.einsum('ok,nk->on', w_ref[...], col,
                     preferred_element_type=jnp.float32)
    acc = acc + b_ref[...]                         # (Cout, 1) broadcast over lanes
    for b in range(bblk):
        o_ref[b] = acc[:, b * HW4:(b + 1) * HW4].astype(o_ref.dtype)


def _pick_batch_block(n, cap=4):
    """Largest divisor of n that is <= cap (keeps the per-step VMEM set small)."""
    bb = min(n, cap)
    while n % bb:
        bb -= 1
    return bb


def mean_pool_conv(x_nchw, weight_oihw, bias, *, batch_block=None):
    """MeanPoolConv forward.  x_nchw: (N, Cin, H, W) -> (N, Cout, H//2, W//2)."""
    N, Cin, H, W = x_nchw.shape
    Cout, _, K, _ = weight_oihw.shape
    assert H % 2 == 0 and W % 2 == 0, "MeanPoolConv assumes even H, W"
    assert K % 2 == 1, "padding=(K-1)//2 'same' conv assumes odd kernel_size"
    pad = (K - 1) // 2
    H2, W2 = H // 2, W // 2
    HW4 = H2 * W2
    KKC = K * K * Cin
    bblk = batch_block or _pick_batch_block(N)
    assert N % bblk == 0

    # --- input glue: ONE fused pass (NCHW->NHWC transpose + bf16 cast); the
    #     reshape into (N, H2, 2, W2, 2*Cin) pooling blocks is a free regroup.
    #     Models that already carry NHWC/bf16 activations can skip this pass.
    x_blocks = (jnp.transpose(x_nchw, (0, 2, 3, 1))
                .reshape(N, H2, 2, W2, 2 * Cin).astype(jnp.bfloat16))

    # weights: OIHW -> (Cout, K, K, Cin) -> (Cout, K*K*Cin); col index is
    # (kh*K + kw)*Cin + ci.  Mean-pool 1/4 folded here (exact in bf16).
    w2 = (jnp.transpose(weight_oihw, (0, 2, 3, 1)).reshape(Cout, KKC)
          * 0.25).astype(jnp.bfloat16)
    b2 = bias.reshape(Cout, 1).astype(jnp.float32)

    kernel = functools.partial(_mean_pool_conv_kernel,
                               K=K, pad=pad, cin=Cin, bblk=bblk)
    out_flat = pl.pallas_call(
        kernel,
        out_shape=jax.ShapeDtypeStruct((N, Cout, HW4), jnp.float32),
        grid=(N // bblk,),
        in_specs=[
            pl.BlockSpec((bblk, H2, 2, W2, 2 * Cin), lambda n: (n, 0, 0, 0, 0)),
            # Weights / bias are grid-constant.  (pl.Buffered(1) or a persistent
            # scratch copy would also drop their double-buffer copy; left at the
            # default for robustness — they are tiny.)
            pl.BlockSpec((Cout, KKC), lambda n: (0, 0)),
            pl.BlockSpec((Cout, 1), lambda n: (0, 0)),
        ],
        out_specs=pl.BlockSpec((bblk, Cout, HW4), lambda n: (n, 0, 0)),
        scratch_shapes=[
            pltpu.VMEM((bblk, H2 + 2 * pad, W2 + 2 * pad, Cin), jnp.bfloat16),
        ],
        compiler_params=pltpu.CompilerParams(
            dimension_semantics=("parallel",),          # megacore / v7x 2-TC sharding
            vmem_limit_bytes=48 * 1024 * 1024),         # > scoped defaults, < v7x 64 MiB
    )(x_blocks, w2, b2)

    # (N, Cout, HW4) -> (N, Cout, H2, W2): pure metadata reshape, NO transpose.
    return out_flat.reshape(N, Cout, H2, W2)


def _reference(x_nchw, weight_oihw, bias):
    """Pure-JAX f32 reference: pool (2x2 mean, stride 2) then 'same' conv."""
    pooled = (x_nchw[:, :, ::2, ::2] + x_nchw[:, :, 1::2, ::2] +
              x_nchw[:, :, ::2, 1::2] + x_nchw[:, :, 1::2, 1::2]) / 4.0
    pad = (weight_oihw.shape[2] - 1) // 2
    y = jax.lax.conv_general_dilated(
        pooled, weight_oihw, window_strides=(1, 1),
        padding=((pad, pad), (pad, pad)),
        dimension_numbers=("NCHW", "OIHW", "NCHW"),
        precision=jax.lax.Precision.HIGHEST)
    return y + bias[None, :, None, None]


if __name__ == "__main__":
    # MeanPoolConv(input_dim=4, output_dim=8, kernel_size=3)
    N, Cin, Cout, H, W, K = 2, 4, 8, 16, 16, 3

    key = jax.random.PRNGKey(0)
    kx, kw_, kb = jax.random.split(key, 3)
    x = jax.random.normal(kx, (N, Cin, H, W), dtype=jnp.float32)
    # deterministic synthetic init (shapes match nn.Conv2d(Cin, Cout, K))
    fan_in = Cin * K * K
    bound = 1.0 / np.sqrt(fan_in)
    weight = jax.random.uniform(kw_, (Cout, Cin, K, K), jnp.float32, -bound, bound)
    bias = jax.random.uniform(kb, (Cout,), jnp.float32, -bound, bound)

    fwd = jax.jit(mean_pool_conv)
    out = jax.block_until_ready(fwd(x, weight, bias))

    ref = _reference(x, weight, bias)
    # bf16 MXU operands with f32 accumulation vs. f32/HIGHEST reference:
    # tolerance reflects bf16 quantization of activations/weights (~1e-2 rel).
    np.testing.assert_allclose(np.asarray(out), np.asarray(ref),
                               rtol=2e-2, atol=2e-2)
    assert out.shape == (N, Cout, H // 2, W // 2)
    print("KERNEL_OK")
</pallas_src>

<mosaic_0001>
module attributes {stable_mosaic.version = 11 : i64} {
  func.func @_mean_pool_conv_kernel(%arg0: i32, %arg1: memref<2x8x2x8x8xbf16, #tpu.memory_space<vmem>>, %arg2: memref<8x36xbf16, #tpu.memory_space<vmem>>, %arg3: memref<8x1xf32, #tpu.memory_space<vmem>>, %arg4: memref<2x8x64xf32, #tpu.memory_space<vmem>>, %arg5: memref<2x10x10x4xbf16, #tpu.memory_space<vmem>>) attributes {dimension_semantics = [#tpu.dimension_semantics<parallel>], iteration_bounds = array<i64: 1>, scalar_prefetch = 0 : i64, scratch_operands = 1 : i64, tpu.core_type = #tpu.core_type<tc>, window_params = [{transform_indices = @transform_0, window_bounds = array<i64: 2, 8, 2, 8, 8>}, {pipeline_mode = #tpu.pipeline_mode<synchronous>, transform_indices = @transform_1, window_bounds = array<i64: 8, 36>}, {pipeline_mode = #tpu.pipeline_mode<synchronous>, transform_indices = @transform_2, window_bounds = array<i64: 8, 1>}, {transform_indices = @transform_3, window_bounds = array<i64: 2, 8, 64>}]} {
    %cst = arith.constant 0.000000e+00 : bf16
    %0 = vector.broadcast %cst : bf16 to vector<2x1x10x4xbf16>
    %c0 = arith.constant 0 : index
    %c0_0 = arith.constant 0 : index
    %c0_1 = arith.constant 0 : index
    %c0_2 = arith.constant 0 : index
    %1 = vector.load %arg5[%c0, %c0_0, %c0_1, %c0_2] : memref<2x10x10x4xbf16, #tpu.memory_space<vmem>>, vector<2x1x10x4xbf16>
    tpu.vector_store %arg5[%c0, %c0_0, %c0_1, %c0_2], %0 {strides = array<i32>} : memref<2x10x10x4xbf16, #tpu.memory_space<vmem>>, vector<2x1x10x4xbf16>,
    %c0_3 = arith.constant 0 : index
    %c9 = arith.constant 9 : index
    %c0_4 = arith.constant 0 : index
    %c0_5 = arith.constant 0 : index
    %2 = vector.load %arg5[%c0_3, %c9, %c0_4, %c0_5] : memref<2x10x10x4xbf16, #tpu.memory_space<vmem>>, vector<2x1x10x4xbf16>
    tpu.vector_store %arg5[%c0_3, %c9, %c0_4, %c0_5], %0 {strides = array<i32>} : memref<2x10x10x4xbf16, #tpu.memory_space<vmem>>, vector<2x1x10x4xbf16>,
    %cst_6 = arith.constant 0.000000e+00 : bf16
    %3 = vector.broadcast %cst_6 : bf16 to vector<2x8x1x4xbf16>
    %c0_7 = arith.constant 0 : index
    %c1 = arith.constant 1 : index
    %c0_8 = arith.constant 0 : index
    %c0_9 = arith.constant 0 : index
    %4 = vector.load %arg5[%c0_7, %c1, %c0_8, %c0_9] : memref<2x10x10x4xbf16, #tpu.memory_space<vmem>>, vector<2x8x1x4xbf16>
    tpu.vector_store %arg5[%c0_7, %c1, %c0_8, %c0_9], %3 {strides = array<i32>} : memref<2x10x10x4xbf16, #tpu.memory_space<vmem>>, vector<2x8x1x4xbf16>,
    %c0_10 = arith.constant 0 : index
    %c1_11 = arith.constant 1 : index
    %c9_12 = arith.constant 9 : index
    %c0_13 = arith.constant 0 : index
    %5 = vector.load %arg5[%c0_10, %c1_11, %c9_12, %c0_13] : memref<2x10x10x4xbf16, #tpu.memory_space<vmem>>, vector<2x8x1x4xbf16>
    tpu.vector_store %arg5[%c0_10, %c1_11, %c9_12, %c0_13], %3 {strides = array<i32>} : memref<2x10x10x4xbf16, #tpu.memory_space<vmem>>, vector<2x8x1x4xbf16>,
    %c0_14 = arith.constant 0 : index
    %c0_15 = arith.constant 0 : index
    %c0_16 = arith.constant 0 : index
    %c0_17 = arith.constant 0 : index
    %c0_18 = arith.constant 0 : index
    %6 = vector.load %arg1[%c0_14, %c0_15, %c0_16, %c0_17, %c0_18] : memref<2x8x2x8x8xbf16, #tpu.memory_space<vmem>>, vector<1x8x2x8x8xbf16>
    %7 = vector.shape_cast %6 : vector<1x8x2x8x8xbf16> to vector<8x2x8x8xbf16>
    %8 = arith.extf %7 : vector<8x2x8x8xbf16> to vector<8x2x8x8xf32>
    %9 = vector.extract_strided_slice %8 {offsets = [0, 0, 0, 0], sizes = [8, 1, 8, 8], strides = [1, 1, 1, 1]} : vector<8x2x8x8xf32> to vector<8x1x8x8xf32>
    %10 = vector.shape_cast %9 : vector<8x1x8x8xf32> to vector<8x8x8xf32>
    %11 = vector.extract_strided_slice %8 {offsets = [0, 1, 0, 0], sizes = [8, 1, 8, 8], strides = [1, 1, 1, 1]} : vector<8x2x8x8xf32> to vector<8x1x8x8xf32>
    %12 = vector.shape_cast %11 : vector<8x1x8x8xf32> to vector<8x8x8xf32>
    %13 = arith.addf %10, %12 : vector<8x8x8xf32>
    %14 = vector.extract_strided_slice %13 {offsets = [0, 0, 0], sizes = [8, 8, 4], strides = [1, 1, 1]} : vector<8x8x8xf32> to vector<8x8x4xf32>
    %15 = vector.extract_strided_slice %13 {offsets = [0, 0, 4], sizes = [8, 8, 4], strides = [1, 1, 1]} : vector<8x8x8xf32> to vector<8x8x4xf32>
    %16 = arith.addf %14, %15 : vector<8x8x4xf32>
    %17 = arith.truncf %16 : vector<8x8x4xf32> to vector<8x8x4xbf16>
    %c0_19 = arith.constant 0 : index
    %c1_20 = arith.constant 1 : index
    %c1_21 = arith.constant 1 : index
    %c0_22 = arith.constant 0 : index
    %18 = vector.load %arg5[%c0_19, %c1_20, %c1_21, %c0_22] : memref<2x10x10x4xbf16, #tpu.memory_space<vmem>>, vector<1x8x8x4xbf16>
    %19 = vector.shape_cast %18 : vector<1x8x8x4xbf16> to vector<8x8x4xbf16>
    %20 = vector.shape_cast %17 : vector<8x8x4xbf16> to vector<1x8x8x4xbf16>
    tpu.vector_store %arg5[%c0_19, %c1_20, %c1_21, %c0_22], %20 {strides = array<i32>} : memref<2x10x10x4xbf16, #tpu.memory_space<vmem>>, vector<1x8x8x4xbf16>,
    %c1_23 = arith.constant 1 : index
    %c0_24 = arith.constant 0 : index
    %c0_25 = arith.constant 0 : index
    %c0_26 = arith.constant 0 : index
    %c0_27 = arith.constant 0 : index
    %21 = vector.load %arg1[%c1_23, %c0_24, %c0_25, %c0_26, %c0_27] : memref<2x8x2x8x8xbf16, #tpu.memory_space<vmem>>, vector<1x8x2x8x8xbf16>
    %22 = vector.shape_cast %21 : vector<1x8x2x8x8xbf16> to vector<8x2x8x8xbf16>
    %23 = arith.extf %22 : vector<8x2x8x8xbf16> to vector<8x2x8x8xf32>
    %24 = vector.extract_strided_slice %23 {offsets = [0, 0, 0, 0], sizes = [8, 1, 8, 8], strides = [1, 1, 1, 1]} : vector<8x2x8x8xf32> to vector<8x1x8x8xf32>
    %25 = vector.shape_cast %24 : vector<8x1x8x8xf32> to vector<8x8x8xf32>
    %26 = vector.extract_strided_slice %23 {offsets = [0, 1, 0, 0], sizes = [8, 1, 8, 8], strides = [1, 1, 1, 1]} : vector<8x2x8x8xf32> to vector<8x1x8x8xf32>
    %27 = vector.shape_cast %26 : vector<8x1x8x8xf32> to vector<8x8x8xf32>
    %28 = arith.addf %25, %27 : vector<8x8x8xf32>
    %29 = vector.extract_strided_slice %28 {offsets = [0, 0, 0], sizes = [8, 8, 4], strides = [1, 1, 1]} : vector<8x8x8xf32> to vector<8x8x4xf32>
    %30 = vector.extract_strided_slice %28 {offsets = [0, 0, 4], sizes = [8, 8, 4], strides = [1, 1, 1]} : vector<8x8x8xf32> to vector<8x8x4xf32>
    %31 = arith.addf %29, %30 : vector<8x8x4xf32>
    %32 = arith.truncf %31 : vector<8x8x4xf32> to vector<8x8x4xbf16>
    %c1_28 = arith.constant 1 : index
    %c1_29 = arith.constant 1 : index
    %c1_30 = arith.constant 1 : index
    %c0_31 = arith.constant 0 : index
    %33 = vector.load %arg5[%c1_28, %c1_29, %c1_30, %c0_31] : memref<2x10x10x4xbf16, #tpu.memory_space<vmem>>, vector<1x8x8x4xbf16>
    %34 = vector.shape_cast %33 : vector<1x8x8x4xbf16> to vector<8x8x4xbf16>
    %35 = vector.shape_cast %32 : vector<8x8x4xbf16> to vector<1x8x8x4xbf16>
    tpu.vector_store %arg5[%c1_28, %c1_29, %c1_30, %c0_31], %35 {strides = array<i32>} : memref<2x10x10x4xbf16, #tpu.memory_space<vmem>>, vector<1x8x8x4xbf16>,
    %c0_32 = arith.constant 0 : index
    %c0_33 = arith.constant 0 : index
    %c0_34 = arith.constant 0 : index
    %c0_35 = arith.constant 0 : index
    %36 = vector.load %arg5[%c0_32, %c0_33, %c0_34, %c0_35] : memref<2x10x10x4xbf16, #tpu.memory_space<vmem>>, vector<2x10x10x4xbf16>
    %37 = vector.extract_strided_slice %36 {offsets = [0, 0, 0, 0], sizes = [2, 8, 8, 4], strides = [1, 1, 1, 1]} : vector<2x10x10x4xbf16> to vector<2x8x8x4xbf16>
    %38 = vector.extract_strided_slice %36 {offsets = [0, 0, 1, 0], sizes = [2, 8, 8, 4], strides = [1, 1, 1, 1]} : vector<2x10x10x4xbf16> to vector<2x8x8x4xbf16>
    %39 = vector.extract_strided_slice %36 {offsets = [0, 0, 2, 0], sizes = [2, 8, 8, 4], strides = [1, 1, 1, 1]} : vector<2x10x10x4xbf16> to vector<2x8x8x4xbf16>
    %40 = vector.extract_strided_slice %36 {offsets = [0, 1, 0, 0], sizes = [2, 8, 8, 4], strides = [1, 1, 1, 1]} : vector<2x10x10x4xbf16> to vector<2x8x8x4xbf16>
    %41 = vector.extract_strided_slice %36 {offsets = [0, 1, 1, 0], sizes = [2, 8, 8, 4], strides = [1, 1, 1, 1]} : vector<2x10x10x4xbf16> to vector<2x8x8x4xbf16>
    %42 = vector.extract_strided_slice %36 {offsets = [0, 1, 2, 0], sizes = [2, 8, 8, 4], strides = [1, 1, 1, 1]} : vector<2x10x10x4xbf16> to vector<2x8x8x4xbf16>
    %43 = vector.extract_strided_slice %36 {offsets = [0, 2, 0, 0], sizes = [2, 8, 8, 4], strides = [1, 1, 1, 1]} : vector<2x10x10x4xbf16> to vector<2x8x8x4xbf16>
    %44 = vector.extract_strided_slice %36 {offsets = [0, 2, 1, 0], sizes = [2, 8, 8, 4], strides = [1, 1, 1, 1]} : vector<2x10x10x4xbf16> to vector<2x8x8x4xbf16>
    %45 = vector.extract_strided_slice %36 {offsets = [0, 2, 2, 0], sizes = [2, 8, 8, 4], strides = [1, 1, 1, 1]} : vector<2x10x10x4xbf16> to vector<2x8x8x4xbf16>
    %46 = tpu.concatenate %37, %38, %39, %40, %41, %42, %43, %44, %45 in 3 : vector<2x8x8x4xbf16>, vector<2x8x8x4xbf16>, vector<2x8x8x4xbf16>, vector<2x8x8x4xbf16>, vector<2x8x8x4xbf16>, vector<2x8x8x4xbf16>, vector<2x8x8x4xbf16>, vector<2x8x8x4xbf16>, vector<2x8x8x4xbf16> -> vector<2x8x8x36xbf16>
    %47 = vector.shape_cast %46 : vector<2x8x8x36xbf16> to vector<128x36xbf16>
    %c0_36 = arith.constant 0 : index
    %c0_37 = arith.constant 0 : index
    %48 = vector.load %arg2[%c0_36, %c0_37] : memref<8x36xbf16, #tpu.memory_space<vmem>>, vector<8x36xbf16>
    "tpu.trace_start"() <{level = 10 : i32, message = "ok,nk->on"}> : () -> ()
    %cst_38 = arith.constant dense<0.000000e+00> : vector<8x128xf32>
    %49 = tpu.matmul %48, %47, %cst_38 {dimension_numbers = #tpu.dot_dimension_numbers<[1], [1], [0], [0], [0, 0, 1, 0], [], []>} : vector<8x36xbf16>, vector<128x36xbf16>, vector<8x128xf32> -> vector<8x128xf32>
    "tpu.trace_stop"() : () -> ()
    %c0_39 = arith.constant 0 : index
    %c0_40 = arith.constant 0 : index
    %50 = vector.load %arg3[%c0_39, %c0_40] : memref<8x1xf32, #tpu.memory_space<vmem>>, vector<8x1xf32>
    %51 = vector.broadcast %50 : vector<8x1xf32> to vector<8x128xf32>
    %52 = arith.addf %49, %51 : vector<8x128xf32>
    %53 = vector.extract_strided_slice %52 {offsets = [0, 0], sizes = [8, 64], strides = [1, 1]} : vector<8x128xf32> to vector<8x64xf32>
    %c0_41 = arith.constant 0 : index
    %c0_42 = arith.constant 0 : index
    %c0_43 = arith.constant 0 : index
    %54 = vector.load %arg4[%c0_41, %c0_42, %c0_43] : memref<2x8x64xf32, #tpu.memory_space<vmem>>, vector<1x8x64xf32>
    %55 = vector.shape_cast %54 : vector<1x8x64xf32> to vector<8x64xf32>
    %56 = vector.shape_cast %53 : vector<8x64xf32> to vector<1x8x64xf32>
    tpu.vector_store %arg4[%c0_41, %c0_42, %c0_43], %56 {strides = array<i32>} : memref<2x8x64xf32, #tpu.memory_space<vmem>>, vector<1x8x64xf32>,
    %57 = vector.extract_strided_slice %52 {offsets = [0, 64], sizes = [8, 64], strides = [1, 1]} : vector<8x128xf32> to vector<8x64xf32>
    %c1_44 = arith.constant 1 : index
    %c0_45 = arith.constant 0 : index
    %c0_46 = arith.constant 0 : index
    %58 = vector.load %arg4[%c1_44, %c0_45, %c0_46] : memref<2x8x64xf32, #tpu.memory_space<vmem>>, vector<1x8x64xf32>
    %59 = vector.shape_cast %58 : vector<1x8x64xf32> to vector<8x64xf32>
    %60 = vector.shape_cast %57 : vector<8x64xf32> to vector<1x8x64xf32>
    tpu.vector_store %arg4[%c1_44, %c0_45, %c0_46], %60 {strides = array<i32>} : memref<2x8x64xf32, #tpu.memory_space<vmem>>, vector<1x8x64xf32>,
    return
  }
  func.func @transform_0(%arg0: i32) -> (i32, i32, i32, i32, i32) {
    %c0_i32 = arith.constant 0 : i32
    %c0_i32_0 = arith.constant 0 : i32
    %c0_i32_1 = arith.constant 0 : i32
    %c0_i32_2 = arith.constant 0 : i32
    %c0_i32_3 = arith.constant 0 : i32
    return %arg0, %c0_i32, %c0_i32_0, %c0_i32_1, %c0_i32_2 : i32, i32, i32, i32, i32
  }
  func.func @transform_1(%arg0: i32) -> (i32, i32) {
    %c0_i32 = arith.constant 0 : i32
    %c0_i32_0 = arith.constant 0 : i32
    %c0_i32_1 = arith.constant 0 : i32
    return %c0_i32, %c0_i32_0 : i32, i32
  }
  func.func @transform_2(%arg0: i32) -> (i32, i32) {
    %c0_i32 = arith.constant 0 : i32
    %c0_i32_0 = arith.constant 0 : i32
    %c0_i32_1 = arith.constant 0 : i32
    return %c0_i32, %c0_i32_0 : i32, i32
  }
  func.func @transform_3(%arg0: i32) -> (i32, i32, i32) {
    %c0_i32 = arith.constant 0 : i32
    %c0_i32_0 = arith.constant 0 : i32
    %c0_i32_1 = arith.constant 0 : i32
    return %arg0, %c0_i32, %c0_i32_0 : i32, i32, i32
  }
}

</mosaic_0001>

<llo_original>
// kernel: mean_pool_conv.1
$region0: #{mean_pool_conv.1}
  #allocation0 [shape = 'u32[]', space=smem, size = 0x4, offset = 0x4, fixed_abs, tag = 'smem constant byte address 0x4 - core index']
  #allocation1 [shape = 'u32[72,128]{1,0:T(1,128)}', space=vmem, size = 0x9000, scoped, tag = 'internal scratch']
  #allocation2 [shape = 'bf16[2,10,10,4]{3,2,1,0:T(8,128)(2,1)}', space=vmem, size = 0x14000, scoped, tag = 'scratch operand']
  %s0 = inlined_call_operand.vmem [shape: bf16[2,8,2,8,8], index: 0, kind: input, shape index: {}]
  %s1 = inlined_call_operand.vmem [shape: bf16[8,36], index: 1, kind: input, shape index: {}]
  %s2 = inlined_call_operand.vmem [shape: f32[8,1], index: 2, kind: input, shape index: {}]
  %s3 = inlined_call_operand.vmem [shape: f32[2,8,64], index: 3, kind: output, shape index: {}]
  %s4 = sld [smem:[#allocation0]]
  $region22: #{mean_pool_conv.1} parent=0
    _
  %s6 = ssub.s32 1, %s4
  %s7 = scalar_select 0, %s6, %s4
  // Predicated region
  $region2: #{mean_pool_conv.1} parent=0 // pred_check
    _
  $region3: #{mean_pool_conv.1} parent=0 // pred_check_branch
    %9 = sbr.rel (0) target = $region5
  $region4: #{mean_pool_conv.1} parent=0 // pred_region
    _
  $region5: #{mean_pool_conv.1} parent=0 // pred_fallthru
    _
  // Predicated region
  $region6: #{mean_pool_conv.1} parent=0 // pred_check
    _
  $region7: #{mean_pool_conv.1} parent=0 // pred_check_branch
    %11 = sbr.rel (0) target = $region9
  $region8: #{mean_pool_conv.1} parent=0 // pred_region
    _
  $region9: #{mean_pool_conv.1} parent=0 // pred_fallthru
    _
  // Predicated region
  $region10: #{mean_pool_conv.1} parent=0 // pred_check
    _
  $region11: #{mean_pool_conv.1} parent=0 // pred_check_branch
    %13 = sbr.rel (0) target = $region13
  $region12: #{mean_pool_conv.1} parent=0 // pred_region
    _
  $region13: #{mean_pool_conv.1} parent=0 // pred_fallthru
    _
  %vm15 = vcmask 27648
  %16 = vst.msk [vmem:[#allocation2] sm:$0xf] %vm15, 0
  %vm17 = vcmask 24576
  %18 = vst.msk [vmem:[#allocation2 + $0x4] sm:$0x1] %vm17, 0
  %19 = vst.msk [vmem:[#allocation2 + $0x50] sm:$0xf] %vm15, 0
  %20 = vst.msk [vmem:[#allocation2 + $0x54] sm:$0x1] %vm17, 0
  %s21 = scalar_lea.vmem [#allocation2], 72
  %22 = vst.msk [vmem:[%s21] sm:$0xf] %vm15, 0
  %23 = vst.msk [vmem:[%s21 + $0x4] sm:$0x1] %vm17, 0
  %24 = vst.msk [vmem:[%s21 + $0x50] sm:$0xf] %vm15, 0
  %25 = vst.msk [vmem:[%s21 + $0x54] sm:$0x1] %vm17, 0
  %s26 = scalar_lea.vmem [#allocation2], 8
  %vm27 = vcmask 24576
  %vm28 = vsmask.f32 256
  %vm29 = vmand %vm27, %vm28
  %v30 = vld [vmem:[%s26] sm:$0x1]
  %v31 = vsel %vm29, 0, %v30
  %32 = vst [vmem:[%s26] sm:$0x1] %v31
  %v33 = vld [vmem:[%s26 + $0x8] sm:$0x1]
  %v34 = vsel %vm29, 0, %v33
  %35 = vst [vmem:[%s26 + $0x8] sm:$0x1] %v34
  %v36 = vld [vmem:[%s26 + $0x10] sm:$0x1]
  %v37 = vsel %vm29, 0, %v36
  %38 = vst [vmem:[%s26 + $0x10] sm:$0x1] %v37
  %v39 = vld [vmem:[%s26 + $0x18] sm:$0x1]
  %v40 = vsel %vm29, 0, %v39
  %41 = vst [vmem:[%s26 + $0x18] sm:$0x1] %v40
  %v42 = vld [vmem:[%s26 + $0x20] sm:$0x1]
  %v43 = vsel %vm29, 0, %v42
  %44 = vst [vmem:[%s26 + $0x20] sm:$0x1] %v43
  %v45 = vld [vmem:[%s26 + $0x28] sm:$0x1]
  %v46 = vsel %vm29, 0, %v45
  %47 = vst [vmem:[%s26 + $0x28] sm:$0x1] %v46
  %v48 = vld [vmem:[%s26 + $0x30] sm:$0x1]
  %v49 = vsel %vm29, 0, %v48
  %50 = vst [vmem:[%s26 + $0x30] sm:$0x1] %v49
  %v51 = vld [vmem:[%s26 + $0x38] sm:$0x1]
  %v52 = vsel %vm29, 0, %v51
  %53 = vst [vmem:[%s26 + $0x38] sm:$0x1] %v52
  %v54 = vld [vmem:[%s26 + $0x50] sm:$0x1]
  %v55 = vsel %vm29, 0, %v54
  %56 = vst [vmem:[%s26 + $0x50] sm:$0x1] %v55
  %v57 = vld [vmem:[%s26 + $0x58] sm:$0x1]
  %v58 = vsel %vm29, 0, %v57
  %59 = vst [vmem:[%s26 + $0x58] sm:$0x1] %v58
  %v60 = vld [vmem:[%s26 + $0x60] sm:$0x1]
  %v61 = vsel %vm29, 0, %v60
  %62 = vst [vmem:[%s26 + $0x60] sm:$0x1] %v61
  %v63 = vld [vmem:[%s26 + $0x68] sm:$0x1]
  %v64 = vsel %vm29, 0, %v63
  %65 = vst [vmem:[%s26 + $0x68] sm:$0x1] %v64
  %v66 = vld [vmem:[%s26 + $0x70] sm:$0x1]
  %v67 = vsel %vm29, 0, %v66
  %68 = vst [vmem:[%s26 + $0x70] sm:$0x1] %v67
  %v69 = vld [vmem:[%s26 + $0x78] sm:$0x1]
  %v70 = vsel %vm29, 0, %v69
  %71 = vst [vmem:[%s26 + $0x78] sm:$0x1] %v70
  %v72 = vld [vmem:[%s26 + $0x80] sm:$0x1]
  %v73 = vsel %vm29, 0, %v72
  %74 = vst [vmem:[%s26 + $0x80] sm:$0x1] %v73
  %v75 = vld [vmem:[%s26 + $0x88] sm:$0x1]
  %v76 = vsel %vm29, 0, %v75
  %77 = vst [vmem:[%s26 + $0x88] sm:$0x1] %v76
  %vm78 = vsmask.f32 7938
  %vm79 = vmand %vm27, %vm78
  %v80 = vld [vmem:[%s26 + $0x4] sm:$0x1]
  %v81 = vsel %vm79, 0, %v80
  %82 = vst [vmem:[%s26 + $0x4] sm:$0x1] %v81
  %v83 = vld [vmem:[%s26 + $0xc] sm:$0x1]
  %v84 = vsel %vm79, 0, %v83
  %85 = vst [vmem:[%s26 + $0xc] sm:$0x1] %v84
  %v86 = vld [vmem:[%s26 + $0x14] sm:$0x1]
  %v87 = vsel %vm79, 0, %v86
  %88 = vst [vmem:[%s26 + $0x14] sm:$0x1] %v87
  %v89 = vld [vmem:[%s26 + $0x1c] sm:$0x1]
  %v90 = vsel %vm79, 0, %v89
  %91 = vst [vmem:[%s26 + $0x1c] sm:$0x1] %v90
  %v92 = vld [vmem:[%s26 + $0x24] sm:$0x1]
  %v93 = vsel %vm79, 0, %v92
  %94 = vst [vmem:[%s26 + $0x24] sm:$0x1] %v93
  %v95 = vld [vmem:[%s26 + $0x2c] sm:$0x1]
  %v96 = vsel %vm79, 0, %v95
  %97 = vst [vmem:[%s26 + $0x2c] sm:$0x1] %v96
  %v98 = vld [vmem:[%s26 + $0x34] sm:$0x1]
  %v99 = vsel %vm79, 0, %v98
  %100 = vst [vmem:[%s26 + $0x34] sm:$0x1] %v99
  %v101 = vld [vmem:[%s26 + $0x3c] sm:$0x1]
  %v102 = vsel %vm79, 0, %v101
  %103 = vst [vmem:[%s26 + $0x3c] sm:$0x1] %v102
  %v104 = vld [vmem:[%s26 + $0x54] sm:$0x1]
  %v105 = vsel %vm79, 0, %v104
  %106 = vst [vmem:[%s26 + $0x54] sm:$0x1] %v105
  %v107 = vld [vmem:[%s26 + $0x5c] sm:$0x1]
  %v108 = vsel %vm79, 0, %v107
  %109 = vst [vmem:[%s26 + $0x5c] sm:$0x1] %v108
  %v110 = vld [vmem:[%s26 + $0x64] sm:$0x1]
  %v111 = vsel %vm79, 0, %v110
  %112 = vst [vmem:[%s26 + $0x64] sm:$0x1] %v111
  %v113 = vld [vmem:[%s26 + $0x6c] sm:$0x1]
  %v114 = vsel %vm79, 0, %v113
  %115 = vst [vmem:[%s26 + $0x6c] sm:$0x1] %v114
  %v116 = vld [vmem:[%s26 + $0x74] sm:$0x1]
  %v117 = vsel %vm79, 0, %v116
  %118 = vst [vmem:[%s26 + $0x74] sm:$0x1] %v117
  %v119 = vld [vmem:[%s26 + $0x7c] sm:$0x1]
  %v120 = vsel %vm79, 0, %v119
  %121 = vst [vmem:[%s26 + $0x7c] sm:$0x1] %v120
  %v122 = vld [vmem:[%s26 + $0x84] sm:$0x1]
  %v123 = vsel %vm79, 0, %v122
  %124 = vst [vmem:[%s26 + $0x84] sm:$0x1] %v123
  %v125 = vld [vmem:[%s26 + $0x8c] sm:$0x1]
  %v126 = vsel %vm79, 0, %v125
  %127 = vst [vmem:[%s26 + $0x8c] sm:$0x1] %v126
  %v128 = vld [vmem:[%s0] sm:$0xf]
  %v129 = vld [vmem:[%s0 + $0x4] sm:$0xf]
  %v130 = vld [vmem:[%s0 + $0x8] sm:$0xf]
  %v131 = vld [vmem:[%s0 + $0xc] sm:$0xf]
  %v132 = vld [vmem:[%s0 + $0x10] sm:$0xf]
  %v133 = vld [vmem:[%s0 + $0x14] sm:$0xf]
  %v134 = vld [vmem:[%s0 + $0x18] sm:$0xf]
  %v135 = vld [vmem:[%s0 + $0x1c] sm:$0xf]
  %v136 = vld [vmem:[%s0 + $0x20] sm:$0xf]
  %v137 = vld [vmem:[%s0 + $0x24] sm:$0xf]
  %v138 = vld [vmem:[%s0 + $0x28] sm:$0xf]
  %v139 = vld [vmem:[%s0 + $0x2c] sm:$0xf]
  %v140 = vld [vmem:[%s0 + $0x30] sm:$0xf]
  %v141 = vld [vmem:[%s0 + $0x34] sm:$0xf]
  %v142 = vld [vmem:[%s0 + $0x38] sm:$0xf]
  %v143 = vld [vmem:[%s0 + $0x3c] sm:$0xf]
  %v144 = vunpack.c.l.bf16 %v128
  %v145 = vunpack.c.l.bf16 %v129
  %v146 = vunpack.c.l.bf16 %v130
  %v147 = vunpack.c.l.bf16 %v131
  %v148 = vunpack.c.l.bf16 %v132
  %v149 = vunpack.c.l.bf16 %v133
  %v150 = vunpack.c.l.bf16 %v134
  %v151 = vunpack.c.l.bf16 %v135
  %v152 = vunpack.c.l.bf16 %v136
  %v153 = vunpack.c.l.bf16 %v137
  %v154 = vunpack.c.l.bf16 %v138
  %v155 = vunpack.c.l.bf16 %v139
  %v156 = vunpack.c.l.bf16 %v140
  %v157 = vunpack.c.l.bf16 %v141
  %v158 = vunpack.c.l.bf16 %v142
  %v159 = vunpack.c.l.bf16 %v143
  %v160 = vadd.f32 %v144, %v145
  %v161 = vadd.f32 %v146, %v147
  %v162 = vadd.f32 %v148, %v149
  %v163 = vadd.f32 %v150, %v151
  %v164 = vadd.f32 %v152, %v153
  %v165 = vadd.f32 %v154, %v155
  %v166 = vadd.f32 %v156, %v157
  %v167 = vadd.f32 %v158, %v159
  %176 = vrot.lane.b32.xlu0 %v160, 124
  %v177 = vpop.permute.xlu0 %176
  %178 = vrot.lane.b32.xlu0 %v161, 124
  %v179 = vpop.permute.xlu0 %178
  %180 = vrot.lane.b32.xlu0 %v162, 124
  %v181 = vpop.permute.xlu0 %180
  %182 = vrot.lane.b32.xlu0 %v163, 124
  %v183 = vpop.permute.xlu0 %182
  %184 = vrot.lane.b32.xlu0 %v164, 124
  %v185 = vpop.permute.xlu0 %184
  %186 = vrot.lane.b32.xlu0 %v165, 124
  %v187 = vpop.permute.xlu0 %186
  %188 = vrot.lane.b32.xlu0 %v166, 124
  %v189 = vpop.permute.xlu0 %188
  %190 = vrot.lane.b32.xlu0 %v167, 124
  %v191 = vpop.permute.xlu0 %190
  %v200 = vadd.f32 %v160, %v177
  %v201 = vadd.f32 %v161, %v179
  %v202 = vadd.f32 %v162, %v181
  %v203 = vadd.f32 %v163, %v183
  %v204 = vadd.f32 %v164, %v185
  %v205 = vadd.f32 %v165, %v187
  %v206 = vadd.f32 %v166, %v189
  %v207 = vadd.f32 %v167, %v191
  %v208 = vpack.c.bf16 %v200, %v200
  %v209 = vpack.c.bf16 %v201, %v201
  %v210 = vpack.c.bf16 %v202, %v202
  %v211 = vpack.c.bf16 %v203, %v203
  %v212 = vpack.c.bf16 %v204, %v204
  %v213 = vpack.c.bf16 %v205, %v205
  %v214 = vpack.c.bf16 %v206, %v206
  %v215 = vpack.c.bf16 %v207, %v207
  %v217 = vshrl.u32 %v208, 16
  %v219 = vrot.slane %v217, 7
  %v220 = vshll.u32 %v208, 16
  %v222 = vor.u32 %v219, %v220
  %v223 = vrot.slane %v219, 4
  %v225 = vshrl.u32 %v209, 16
  %v227 = vrot.slane %v225, 7
  %v228 = vshll.u32 %v209, 16
  %v230 = vor.u32 %v227, %v228
  %v231 = vrot.slane %v227, 4
  %v233 = vshrl.u32 %v210, 16
  %v235 = vrot.slane %v233, 7
  %v236 = vshll.u32 %v210, 16
  %v238 = vor.u32 %v235, %v236
  %v239 = vrot.slane %v235, 4
  %v241 = vshrl.u32 %v211, 16
  %v243 = vrot.slane %v241, 7
  %v244 = vshll.u32 %v211, 16
  %v246 = vor.u32 %v243, %v244
  %v247 = vrot.slane %v243, 4
  %v249 = vshrl.u32 %v212, 16
  %v251 = vrot.slane %v249, 7
  %v252 = vshll.u32 %v212, 16
  %v254 = vor.u32 %v251, %v252
  %v255 = vrot.slane %v251, 4
  %v257 = vshrl.u32 %v213, 16
  %v259 = vrot.slane %v257, 7
  %v260 = vshll.u32 %v213, 16
  %v262 = vor.u32 %v259, %v260
  %v263 = vrot.slane %v259, 4
  %v265 = vshrl.u32 %v214, 16
  %v267 = vrot.slane %v265, 7
  %v268 = vshll.u32 %v214, 16
  %v270 = vor.u32 %v267, %v268
  %v271 = vrot.slane %v267, 4
  %v273 = vshrl.u32 %v215, 16
  %v275 = vrot.slane %v273, 7
  %v276 = vshll.u32 %v215, 16
  %v278 = vor.u32 %v275, %v276
  %v279 = vrot.slane %v275, 4
  %vm296 = vcmask 27648
  %vm297 = vmand %vm296, %vm78
  %v298 = vld [vmem:[%s26] sm:$0xf]
  %v299 = vsel %vm297, %v222, %v298
  %300 = vst [vmem:[%s26] sm:$0xf] %v299
  %v301 = vld [vmem:[%s26 + $0x4] sm:$0x1]
  %v302 = vsel %vm29, %v223, %v301
  %303 = vst [vmem:[%s26 + $0x4] sm:$0x1] %v302
  %v304 = vld [vmem:[%s26 + $0x8] sm:$0xf]
  %v305 = vsel %vm297, %v230, %v304
  %306 = vst [vmem:[%s26 + $0x8] sm:$0xf] %v305
  %v307 = vld [vmem:[%s26 + $0xc] sm:$0x1]
  %v308 = vsel %vm29, %v231, %v307
  %309 = vst [vmem:[%s26 + $0xc] sm:$0x1] %v308
  %v310 = vld [vmem:[%s26 + $0x10] sm:$0xf]
  %v311 = vsel %vm297, %v238, %v310
  %312 = vst [vmem:[%s26 + $0x10] sm:$0xf] %v311
  %v313 = vld [vmem:[%s26 + $0x14] sm:$0x1]
  %v314 = vsel %vm29, %v239, %v313
  %315 = vst [vmem:[%s26 + $0x14] sm:$0x1] %v314
  %v316 = vld [vmem:[%s26 + $0x18] sm:$0xf]
  %v317 = vsel %vm297, %v246, %v316
  %318 = vst [vmem:[%s26 + $0x18] sm:$0xf] %v317
  %v319 = vld [vmem:[%s26 + $0x1c] sm:$0x1]
  %v320 = vsel %vm29, %v247, %v319
  %321 = vst [vmem:[%s26 + $0x1c] sm:$0x1] %v320
  %v322 = vld [vmem:[%s26 + $0x20] sm:$0xf]
  %v323 = vsel %vm297, %v254, %v322
  %324 = vst [vmem:[%s26 + $0x20] sm:$0xf] %v323
  %v325 = vld [vmem:[%s26 + $0x24] sm:$0x1]
  %v326 = vsel %vm29, %v255, %v325
  %327 = vst [vmem:[%s26 + $0x24] sm:$0x1] %v326
  %v328 = vld [vmem:[%s26 + $0x28] sm:$0xf]
  %v329 = vsel %vm297, %v262, %v328
  %330 = vst [vmem:[%s26 + $0x28] sm:$0xf] %v329
  %v331 = vld [vmem:[%s26 + $0x2c] sm:$0x1]
  %v332 = vsel %vm29, %v263, %v331
  %333 = vst [vmem:[%s26 + $0x2c] sm:$0x1] %v332
  %v334 = vld [vmem:[%s26 + $0x30] sm:$0xf]
  %v335 = vsel %vm297, %v270, %v334
  %336 = vst [vmem:[%s26 + $0x30] sm:$0xf] %v335
  %v337 = vld [vmem:[%s26 + $0x34] sm:$0x1]
  %v338 = vsel %vm29, %v271, %v337
  %339 = vst [vmem:[%s26 + $0x34] sm:$0x1] %v338
  %v340 = vld [vmem:[%s26 + $0x38] sm:$0xf]
  %v341 = vsel %vm297, %v278, %v340
  %342 = vst [vmem:[%s26 + $0x38] sm:$0xf] %v341
  %v343 = vld [vmem:[%s26 + $0x3c] sm:$0x1]
  %v344 = vsel %vm29, %v279, %v343
  %345 = vst [vmem:[%s26 + $0x3c] sm:$0x1] %v344
  %s346 = scalar_lea.vmem %s0, 64
  %v347 = vld [vmem:[%s346] sm:$0xf]
  %v348 = vld [vmem:[%s346 + $0x4] sm:$0xf]
  %v349 = vld [vmem:[%s346 + $0x8] sm:$0xf]
  %v350 = vld [vmem:[%s346 + $0xc] sm:$0xf]
  %v351 = vld [vmem:[%s346 + $0x10] sm:$0xf]
  %v352 = vld [vmem:[%s346 + $0x14] sm:$0xf]
  %v353 = vld [vmem:[%s346 + $0x18] sm:$0xf]
  %v354 = vld [vmem:[%s346 + $0x1c] sm:$0xf]
  %v355 = vld [vmem:[%s346 + $0x20] sm:$0xf]
  %v356 = vld [vmem:[%s346 + $0x24] sm:$0xf]
  %v357 = vld [vmem:[%s346 + $0x28] sm:$0xf]
  %v358 = vld [vmem:[%s346 + $0x2c] sm:$0xf]
  %v359 = vld [vmem:[%s346 + $0x30] sm:$0xf]
  %v360 = vld [vmem:[%s346 + $0x34] sm:$0xf]
  %v361 = vld [vmem:[%s346 + $0x38] sm:$0xf]
  %v362 = vld [vmem:[%s346 + $0x3c] sm:$0xf]
  %v363 = vunpack.c.l.bf16 %v347
  %v364 = vunpack.c.l.bf16 %v348
  %v365 = vunpack.c.l.bf16 %v349
  %v366 = vunpack.c.l.bf16 %v350
  %v367 = vunpack.c.l.bf16 %v351
  %v368 = vunpack.c.l.bf16 %v352
  %v369 = vunpack.c.l.bf16 %v353
  %v370 = vunpack.c.l.bf16 %v354
  %v371 = vunpack.c.l.bf16 %v355
  %v372 = vunpack.c.l.bf16 %v356
  %v373 = vunpack.c.l.bf16 %v357
  %v374 = vunpack.c.l.bf16 %v358
  %v375 = vunpack.c.l.bf16 %v359
  %v376 = vunpack.c.l.bf16 %v360
  %v377 = vunpack.c.l.bf16 %v361
  %v378 = vunpack.c.l.bf16 %v362
  %v379 = vadd.f32 %v363, %v364
  %v380 = vadd.f32 %v365, %v366
  %v381 = vadd.f32 %v367, %v368
  %v382 = vadd.f32 %v369, %v370
  %v383 = vadd.f32 %v371, %v372
  %v384 = vadd.f32 %v373, %v374
  %v385 = vadd.f32 %v375, %v376
  %v386 = vadd.f32 %v377, %v378
  %395 = vrot.lane.b32.xlu0 %v379, 124
  %v396 = vpop.permute.xlu0 %395
  %397 = vrot.lane.b32.xlu0 %v380, 124
  %v398 = vpop.permute.xlu0 %397
  %399 = vrot.lane.b32.xlu0 %v381, 124
  %v400 = vpop.permute.xlu0 %399
  %401 = vrot.lane.b32.xlu0 %v382, 124
  %v402 = vpop.permute.xlu0 %401
  %403 = vrot.lane.b32.xlu0 %v383, 124
  %v404 = vpop.permute.xlu0 %403
  %405 = vrot.lane.b32.xlu0 %v384, 124
  %v406 = vpop.permute.xlu0 %405
  %407 = vrot.lane.b32.xlu0 %v385, 124
  %v408 = vpop.permute.xlu0 %407
  %409 = vrot.lane.b32.xlu0 %v386, 124
  %v410 = vpop.permute.xlu0 %409
  %v419 = vadd.f32 %v379, %v396
  %v420 = vadd.f32 %v380, %v398
  %v421 = vadd.f32 %v381, %v400
  %v422 = vadd.f32 %v382, %v402
  %v423 = vadd.f32 %v383, %v404
  %v424 = vadd.f32 %v384, %v406
  %v425 = vadd.f32 %v385, %v408
  %v426 = vadd.f32 %v386, %v410
  %v427 = vpack.c.bf16 %v419, %v419
  %v428 = vpack.c.bf16 %v420, %v420
  %v429 = vpack.c.bf16 %v421, %v421
  %v430 = vpack.c.bf16 %v422, %v422
  %v431 = vpack.c.bf16 %v423, %v423
  %v432 = vpack.c.bf16 %v424, %v424
  %v433 = vpack.c.bf16 %v425, %v425
  %v434 = vpack.c.bf16 %v426, %v426
  %v436 = vshrl.u32 %v427, 16
  %v438 = vrot.slane %v436, 7
  %v439 = vshll.u32 %v427, 16
  %v441 = vor.u32 %v438, %v439
  %v442 = vrot.slane %v438, 4
  %v444 = vshrl.u32 %v428, 16
  %v446 = vrot.slane %v444, 7
  %v447 = vshll.u32 %v428, 16
  %v449 = vor.u32 %v446, %v447
  %v450 = vrot.slane %v446, 4
  %v452 = vshrl.u32 %v429, 16
  %v454 = vrot.slane %v452, 7
  %v455 = vshll.u32 %v429, 16
  %v457 = vor.u32 %v454, %v455
  %v458 = vrot.slane %v454, 4
  %v460 = vshrl.u32 %v430, 16
  %v462 = vrot.slane %v460, 7
  %v463 = vshll.u32 %v430, 16
  %v465 = vor.u32 %v462, %v463
  %v466 = vrot.slane %v462, 4
  %v468 = vshrl.u32 %v431, 16
  %v470 = vrot.slane %v468, 7
  %v471 = vshll.u32 %v431, 16
  %v473 = vor.u32 %v470, %v471
  %v474 = vrot.slane %v470, 4
  %v476 = vshrl.u32 %v432, 16
  %v478 = vrot.slane %v476, 7
  %v479 = vshll.u32 %v432, 16
  %v481 = vor.u32 %v478, %v479
  %v482 = vrot.slane %v478, 4
  %v484 = vshrl.u32 %v433, 16
  %v486 = vrot.slane %v484, 7
  %v487 = vshll.u32 %v433, 16
  %v489 = vor.u32 %v486, %v487
  %v490 = vrot.slane %v486, 4
  %v492 = vshrl.u32 %v434, 16
  %v494 = vrot.slane %v492, 7
  %v495 = vshll.u32 %v434, 16
  %v497 = vor.u32 %v494, %v495
  %v498 = vrot.slane %v494, 4
  %s515 = scalar_lea.vmem [#allocation2], 88
  %v516 = vld [vmem:[%s515] sm:$0xf]
  %v517 = vsel %vm297, %v441, %v516
  %518 = vst [vmem:[%s515] sm:$0xf] %v517
  %v519 = vld [vmem:[%s515 + $0x4] sm:$0x1]
  %v520 = vsel %vm29, %v442, %v519
  %521 = vst [vmem:[%s515 + $0x4] sm:$0x1] %v520
  %v522 = vld [vmem:[%s515 + $0x8] sm:$0xf]
  %v523 = vsel %vm297, %v449, %v522
  %524 = vst [vmem:[%s515 + $0x8] sm:$0xf] %v523
  %v525 = vld [vmem:[%s515 + $0xc] sm:$0x1]
  %v526 = vsel %vm29, %v450, %v525
  %527 = vst [vmem:[%s515 + $0xc] sm:$0x1] %v526
  %v528 = vld [vmem:[%s515 + $0x10] sm:$0xf]
  %v529 = vsel %vm297, %v457, %v528
  %530 = vst [vmem:[%s515 + $0x10] sm:$0xf] %v529
  %v531 = vld [vmem:[%s515 + $0x14] sm:$0x1]
  %v532 = vsel %vm29, %v458, %v531
  %533 = vst [vmem:[%s515 + $0x14] sm:$0x1] %v532
  %v534 = vld [vmem:[%s515 + $0x18] sm:$0xf]
  %v535 = vsel %vm297, %v465, %v534
  %536 = vst [vmem:[%s515 + $0x18] sm:$0xf] %v535
  %v537 = vld [vmem:[%s515 + $0x1c] sm:$0x1]
  %v538 = vsel %vm29, %v466, %v537
  %539 = vst [vmem:[%s515 + $0x1c] sm:$0x1] %v538
  %v540 = vld [vmem:[%s515 + $0x20] sm:$0xf]
  %v541 = vsel %vm297, %v473, %v540
  %542 = vst [vmem:[%s515 + $0x20] sm:$0xf] %v541
  %v543 = vld [vmem:[%s515 + $0x24] sm:$0x1]
  %v544 = vsel %vm29, %v474, %v543
  %545 = vst [vmem:[%s515 + $0x24] sm:$0x1] %v544
  %v546 = vld [vmem:[%s515 + $0x28] sm:$0xf]
  %v547 = vsel %vm297, %v481, %v546
  %548 = vst [vmem:[%s515 + $0x28] sm:$0xf] %v547
  %v549 = vld [vmem:[%s515 + $0x2c] sm:$0x1]
  %v550 = vsel %vm29, %v482, %v549
  %551 = vst [vmem:[%s515 + $0x2c] sm:$0x1] %v550
  %v552 = vld [vmem:[%s515 + $0x30] sm:$0xf]
  %v553 = vsel %vm297, %v489, %v552
  %554 = vst [vmem:[%s515 + $0x30] sm:$0xf] %v553
  %v555 = vld [vmem:[%s515 + $0x34] sm:$0x1]
  %v556 = vsel %vm29, %v490, %v555
  %557 = vst [vmem:[%s515 + $0x34] sm:$0x1] %v556
  %v558 = vld [vmem:[%s515 + $0x38] sm:$0xf]
  %v559 = vsel %vm297, %v497, %v558
  %560 = vst [vmem:[%s515 + $0x38] sm:$0xf] %v559
  %v561 = vld [vmem:[%s515 + $0x3c] sm:$0x1]
  %v562 = vsel %vm29, %v498, %v561
  %563 = vst [vmem:[%s515 + $0x3c] sm:$0x1] %v562
  %v564 = vld [vmem:[#allocation2] sm:$0xf]
  %v565 = vld [vmem:[#allocation2 + $0x4] sm:$0x1]
  %v566 = vld [vmem:[#allocation2 + $0x8] sm:$0xf]
  %v567 = vld [vmem:[#allocation2 + $0xc] sm:$0x1]
  %v568 = vld [vmem:[#allocation2 + $0x10] sm:$0xf]
  %v569 = vld [vmem:[#allocation2 + $0x14] sm:$0x1]
  %v570 = vld [vmem:[#allocation2 + $0x18] sm:$0xf]
  %v571 = vld [vmem:[#allocation2 + $0x1c] sm:$0x1]
  %v572 = vld [vmem:[#allocation2 + $0x20] sm:$0xf]
  %v573 = vld [vmem:[#allocation2 + $0x24] sm:$0x1]
  %v574 = vld [vmem:[#allocation2 + $0x28] sm:$0xf]
  %v575 = vld [vmem:[#allocation2 + $0x2c] sm:$0x1]
  %v576 = vld [vmem:[#allocation2 + $0x30] sm:$0xf]
  %v577 = vld [vmem:[#allocation2 + $0x34] sm:$0x1]
  %v578 = vld [vmem:[#allocation2 + $0x38] sm:$0xf]
  %v579 = vld [vmem:[#allocation2 + $0x3c] sm:$0x1]
  %v580 = vld [vmem:[#allocation2 + $0x40] sm:$0xf]
  %v581 = vld [vmem:[#allocation2 + $0x44] sm:$0x1]
  %v582 = vld [vmem:[#allocation2 + $0x48] sm:$0xf]
  %v583 = vld [vmem:[#allocation2 + $0x4c] sm:$0x1]
  %v584 = vld [vmem:[#allocation2 + $0x50] sm:$0xf]
  %v585 = vld [vmem:[#allocation2 + $0x54] sm:$0x1]
  %v586 = vld [vmem:[#allocation2 + $0x58] sm:$0xf]
  %v587 = vld [vmem:[#allocation2 + $0x5c] sm:$0x1]
  %v588 = vld [vmem:[#allocation2 + $0x60] sm:$0xf]
  %v589 = vld [vmem:[#allocation2 + $0x64] sm:$0x1]
  %v590 = vld [vmem:[#allocation2 + $0x68] sm:$0xf]
  %v591 = vld [vmem:[#allocation2 + $0x6c] sm:$0x1]
  %v592 = vld [vmem:[#allocation2 + $0x70] sm:$0xf]
  %v593 = vld [vmem:[#allocation2 + $0x74] sm:$0x1]
  %v594 = vld [vmem:[#allocation2 + $0x78] sm:$0xf]
  %v595 = vld [vmem:[#allocation2 + $0x7c] sm:$0x1]
  %v596 = vld [vmem:[#allocation2 + $0x80] sm:$0xf]
  %v597 = vld [vmem:[#allocation2 + $0x84] sm:$0x1]
  %v598 = vld [vmem:[#allocation2 + $0x88] sm:$0xf]
  %v599 = vld [vmem:[#allocation2 + $0x8c] sm:$0x1]
  %v600 = vld [vmem:[#allocation2 + $0x90] sm:$0xf]
  %v601 = vld [vmem:[#allocation2 + $0x94] sm:$0x1]
  %v602 = vld [vmem:[#allocation2 + $0x98] sm:$0xf]
  %v603 = vld [vmem:[#allocation2 + $0x9c] sm:$0x1]
  %v636 = vunpack.c.l.b16 %v564
  %v637 = vunpack.c.l.b16 %v565
  %v638 = vunpack.c.l.b16 %v566
  %v639 = vunpack.c.l.b16 %v567
  %v640 = vunpack.c.l.b16 %v568
  %v641 = vunpack.c.l.b16 %v569
  %v642 = vunpack.c.l.b16 %v570
  %v643 = vunpack.c.l.b16 %v571
  %v644 = vunpack.c.l.b16 %v572
  %v645 = vunpack.c.l.b16 %v573
  %v646 = vunpack.c.l.b16 %v574
  %v647 = vunpack.c.l.b16 %v575
  %v648 = vunpack.c.l.b16 %v576
  %v649 = vunpack.c.l.b16 %v577
  %v650 = vunpack.c.l.b16 %v578
  %v651 = vunpack.c.l.b16 %v579
  %v652 = vunpack.c.l.b16 %v584
  %v653 = vunpack.c.l.b16 %v585
  %v654 = vunpack.c.l.b16 %v586
  %v655 = vunpack.c.l.b16 %v587
  %v656 = vunpack.c.l.b16 %v588
  %v657 = vunpack.c.l.b16 %v589
  %v658 = vunpack.c.l.b16 %v590
  %v659 = vunpack.c.l.b16 %v591
  %v660 = vunpack.c.l.b16 %v592
  %v661 = vunpack.c.l.b16 %v593
  %v662 = vunpack.c.l.b16 %v594
  %v663 = vunpack.c.l.b16 %v595
  %v664 = vunpack.c.l.b16 %v596
  %v665 = vunpack.c.l.b16 %v597
  %v666 = vunpack.c.l.b16 %v598
  %v667 = vunpack.c.l.b16 %v599
  %v668 = vpack.c.b16 %v637, %v636
  %v669 = vpack.c.b16 %v639, %v638
  %v670 = vpack.c.b16 %v641, %v640
  %v671 = vpack.c.b16 %v643, %v642
  %v672 = vpack.c.b16 %v645, %v644
  %v673 = vpack.c.b16 %v647, %v646
  %v674 = vpack.c.b16 %v649, %v648
  %v675 = vpack.c.b16 %v651, %v650
  %v676 = vpack.c.b16 %v653, %v652
  %v677 = vpack.c.b16 %v655, %v654
  %v678 = vpack.c.b16 %v657, %v656
  %v679 = vpack.c.b16 %v659, %v658
  %v680 = vpack.c.b16 %v661, %v660
  %v681 = vpack.c.b16 %v663, %v662
  %v682 = vpack.c.b16 %v665, %v664
  %v683 = vpack.c.b16 %v667, %v666
  %v685 = vshrl.u32 %v668, 16
  %v687 = vshll.u32 %v668, 16
  %v689 = vrot.slane %v687, 1
  %v690 = vor.u32 %v685, %v689
  %v692 = vshrl.u32 %v669, 16
  %v694 = vshll.u32 %v669, 16
  %v696 = vrot.slane %v694, 1
  %v697 = vor.u32 %v692, %v696
  %v699 = vshrl.u32 %v670, 16
  %v701 = vshll.u32 %v670, 16
  %v703 = vrot.slane %v701, 1
  %v704 = vor.u32 %v699, %v703
  %v706 = vshrl.u32 %v671, 16
  %v708 = vshll.u32 %v671, 16
  %v710 = vrot.slane %v708, 1
  %v711 = vor.u32 %v706, %v710
  %v713 = vshrl.u32 %v672, 16
  %v715 = vshll.u32 %v672, 16
  %v717 = vrot.slane %v715, 1
  %v718 = vor.u32 %v713, %v717
  %v720 = vshrl.u32 %v673, 16
  %v722 = vshll.u32 %v673, 16
  %v724 = vrot.slane %v722, 1
  %v725 = vor.u32 %v720, %v724
  %v727 = vshrl.u32 %v674, 16
  %v729 = vshll.u32 %v674, 16
  %v731 = vrot.slane %v729, 1
  %v732 = vor.u32 %v727, %v731
  %v734 = vshrl.u32 %v675, 16
  %v736 = vshll.u32 %v675, 16
  %v738 = vrot.slane %v736, 1
  %v739 = vor.u32 %v734, %v738
  %v741 = vshrl.u32 %v676, 16
  %v743 = vshll.u32 %v676, 16
  %v745 = vrot.slane %v743, 1
  %v746 = vor.u32 %v741, %v745
  %v748 = vshrl.u32 %v677, 16
  %v750 = vshll.u32 %v677, 16
  %v752 = vrot.slane %v750, 1
  %v753 = vor.u32 %v748, %v752
  %v755 = vshrl.u32 %v678, 16
  %v757 = vshll.u32 %v678, 16
  %v759 = vrot.slane %v757, 1
  %v760 = vor.u32 %v755, %v759
  %v762 = vshrl.u32 %v679, 16
  %v764 = vshll.u32 %v679, 16
  %v766 = vrot.slane %v764, 1
  %v767 = vor.u32 %v762, %v766
  %v769 = vshrl.u32 %v680, 16
  %v771 = vshll.u32 %v680, 16
  %v773 = vrot.slane %v771, 1
  %v774 = vor.u32 %v769, %v773
  %v776 = vshrl.u32 %v681, 16
  %v778 = vshll.u32 %v681, 16
  %v780 = vrot.slane %v778, 1
  %v781 = vor.u32 %v776, %v780
  %v783 = vshrl.u32 %v682, 16
  %v785 = vshll.u32 %v682, 16
  %v787 = vrot.slane %v785, 1
  %v788 = vor.u32 %v783, %v787
  %v790 = vshrl.u32 %v683, 16
  %v792 = vshll.u32 %v683, 16
  %v794 = vrot.slane %v792, 1
  %v795 = vor.u32 %v790, %v794
  %796 = vrot.lane.b32.xlu0 %v690, 4
  %v797 = vpop.permute.xlu0 %796
  %798 = vrot.lane.b32.xlu0 %v697, 4
  %v799 = vpop.permute.xlu0 %798
  %800 = vrot.lane.b32.xlu0 %v704, 4
  %v801 = vpop.permute.xlu0 %800
  %802 = vrot.lane.b32.xlu0 %v711, 4
  %v803 = vpop.permute.xlu0 %802
  %804 = vrot.lane.b32.xlu0 %v718, 4
  %v805 = vpop.permute.xlu0 %804
  %806 = vrot.lane.b32.xlu0 %v725, 4
  %v807 = vpop.permute.xlu0 %806
  %808 = vrot.lane.b32.xlu0 %v732, 4
  %v809 = vpop.permute.xlu0 %808
  %810 = vrot.lane.b32.xlu0 %v739, 4
  %v811 = vpop.permute.xlu0 %810
  %812 = vrot.lane.b32.xlu0 %v746, 4
  %v813 = vpop.permute.xlu0 %812
  %814 = vrot.lane.b32.xlu0 %v753, 4
  %v815 = vpop.permute.xlu0 %814
  %816 = vrot.lane.b32.xlu0 %v760, 4
  %v817 = vpop.permute.xlu0 %816
  %818 = vrot.lane.b32.xlu0 %v767, 4
  %v819 = vpop.permute.xlu0 %818
  %820 = vrot.lane.b32.xlu0 %v774, 4
  %v821 = vpop.permute.xlu0 %820
  %822 = vrot.lane.b32.xlu0 %v781, 4
  %v823 = vpop.permute.xlu0 %822
  %824 = vrot.lane.b32.xlu0 %v788, 4
  %v825 = vpop.permute.xlu0 %824
  %826 = vrot.lane.b32.xlu0 %v795, 4
  %v827 = vpop.permute.xlu0 %826
  %v828 = vrot.slane %v668, 1
  %v829 = vrot.slane %v669, 1
  %v830 = vrot.slane %v670, 1
  %v831 = vrot.slane %v671, 1
  %v832 = vrot.slane %v672, 1
  %v833 = vrot.slane %v673, 1
  %v834 = vrot.slane %v674, 1
  %v835 = vrot.slane %v675, 1
  %v836 = vrot.slane %v676, 1
  %v837 = vrot.slane %v677, 1
  %v838 = vrot.slane %v678, 1
  %v839 = vrot.slane %v679, 1
  %v840 = vrot.slane %v680, 1
  %v841 = vrot.slane %v681, 1
  %v842 = vrot.slane %v682, 1
  %v843 = vrot.slane %v683, 1
  %844 = vrot.lane.b32.xlu0 %v828, 8
  %v845 = vpop.permute.xlu0 %844
  %846 = vrot.lane.b32.xlu0 %v829, 8
  %v847 = vpop.permute.xlu0 %846
  %848 = vrot.lane.b32.xlu0 %v830, 8
  %v849 = vpop.permute.xlu0 %848
  %850 = vrot.lane.b32.xlu0 %v831, 8
  %v851 = vpop.permute.xlu0 %850
  %852 = vrot.lane.b32.xlu0 %v832, 8
  %v853 = vpop.permute.xlu0 %852
  %854 = vrot.lane.b32.xlu0 %v833, 8
  %v855 = vpop.permute.xlu0 %854
  %856 = vrot.lane.b32.xlu0 %v834, 8
  %v857 = vpop.permute.xlu0 %856
  %858 = vrot.lane.b32.xlu0 %v835, 8
  %v859 = vpop.permute.xlu0 %858
  %860 = vrot.lane.b32.xlu0 %v836, 8
  %v861 = vpop.permute.xlu0 %860
  %862 = vrot.lane.b32.xlu0 %v837, 8
  %v863 = vpop.permute.xlu0 %862
  %864 = vrot.lane.b32.xlu0 %v838, 8
  %v865 = vpop.permute.xlu0 %864
  %866 = vrot.lane.b32.xlu0 %v839, 8
  %v867 = vpop.permute.xlu0 %866
  %868 = vrot.lane.b32.xlu0 %v840, 8
  %v869 = vpop.permute.xlu0 %868
  %870 = vrot.lane.b32.xlu0 %v841, 8
  %v871 = vpop.permute.xlu0 %870
  %872 = vrot.lane.b32.xlu0 %v842, 8
  %v873 = vpop.permute.xlu0 %872
  %874 = vrot.lane.b32.xlu0 %v843, 8
  %v875 = vpop.permute.xlu0 %874
  %v878 = vunpack.c.l.b16 %v580
  %v879 = vunpack.c.l.b16 %v600
  %v880 = vpack.c.b16 %v638, %v638
  %v881 = vpack.c.b16 %v640, %v640
  %v882 = vpack.c.b16 %v642, %v642
  %v883 = vpack.c.b16 %v644, %v644
  %v884 = vpack.c.b16 %v646, %v646
  %v885 = vpack.c.b16 %v648, %v648
  %v886 = vpack.c.b16 %v650, %v650
  %v887 = vpack.c.b16 %v878, %v878
  %v888 = vpack.c.b16 %v654, %v654
  %v889 = vpack.c.b16 %v656, %v656
  %v890 = vpack.c.b16 %v658, %v658
  %v891 = vpack.c.b16 %v660, %v660
  %v892 = vpack.c.b16 %v662, %v662
  %v893 = vpack.c.b16 %v664, %v664
  %v894 = vpack.c.b16 %v666, %v666
  %v895 = vpack.c.b16 %v879, %v879
  %896 = vrot.lane.b32.xlu0 %v880, 12
  %v897 = vpop.permute.xlu0 %896
  %898 = vrot.lane.b32.xlu0 %v881, 12
  %v899 = vpop.permute.xlu0 %898
  %900 = vrot.lane.b32.xlu0 %v882, 12
  %v901 = vpop.permute.xlu0 %900
  %902 = vrot.lane.b32.xlu0 %v883, 12
  %v903 = vpop.permute.xlu0 %902
  %904 = vrot.lane.b32.xlu0 %v884, 12
  %v905 = vpop.permute.xlu0 %904
  %906 = vrot.lane.b32.xlu0 %v885, 12
  %v907 = vpop.permute.xlu0 %906
  %908 = vrot.lane.b32.xlu0 %v886, 12
  %v909 = vpop.permute.xlu0 %908
  %910 = vrot.lane.b32.xlu0 %v887, 12
  %v911 = vpop.permute.xlu0 %910
  %912 = vrot.lane.b32.xlu0 %v888, 12
  %v913 = vpop.permute.xlu0 %912
  %914 = vrot.lane.b32.xlu0 %v889, 12
  %v915 = vpop.permute.xlu0 %914
  %916 = vrot.lane.b32.xlu0 %v890, 12
  %v917 = vpop.permute.xlu0 %916
  %918 = vrot.lane.b32.xlu0 %v891, 12
  %v919 = vpop.permute.xlu0 %918
  %920 = vrot.lane.b32.xlu0 %v892, 12
  %v921 = vpop.permute.xlu0 %920
  %922 = vrot.lane.b32.xlu0 %v893, 12
  %v923 = vpop.permute.xlu0 %922
  %924 = vrot.lane.b32.xlu0 %v894, 12
  %v925 = vpop.permute.xlu0 %924
  %926 = vrot.lane.b32.xlu0 %v895, 12
  %v927 = vpop.permute.xlu0 %926
  %v930 = vunpack.c.l.b16 %v581
  %v931 = vunpack.c.l.b16 %v601
  %v932 = vpack.c.b16 %v930, %v878
  %v933 = vpack.c.b16 %v931, %v879
  %v935 = vshrl.u32 %v932, 16
  %v937 = vshll.u32 %v932, 16
  %v939 = vrot.slane %v937, 1
  %v940 = vor.u32 %v935, %v939
  %v942 = vshrl.u32 %v933, 16
  %v944 = vshll.u32 %v933, 16
  %v946 = vrot.slane %v944, 1
  %v947 = vor.u32 %v942, %v946
  %948 = vrot.lane.b32.xlu0 %v697, 16
  %v949 = vpop.permute.xlu0 %948
  %950 = vrot.lane.b32.xlu0 %v704, 16
  %v951 = vpop.permute.xlu0 %950
  %952 = vrot.lane.b32.xlu0 %v711, 16
  %v953 = vpop.permute.xlu0 %952
  %954 = vrot.lane.b32.xlu0 %v718, 16
  %v955 = vpop.permute.xlu0 %954
  %956 = vrot.lane.b32.xlu0 %v725, 16
  %v957 = vpop.permute.xlu0 %956
  %958 = vrot.lane.b32.xlu0 %v732, 16
  %v959 = vpop.permute.xlu0 %958
  %960 = vrot.lane.b32.xlu0 %v739, 16
  %v961 = vpop.permute.xlu0 %960
  %962 = vrot.lane.b32.xlu0 %v940, 16
  %v963 = vpop.permute.xlu0 %962
  %964 = vrot.lane.b32.xlu0 %v753, 16
  %v965 = vpop.permute.xlu0 %964
  %966 = vrot.lane.b32.xlu0 %v760, 16
  %v967 = vpop.permute.xlu0 %966
  %968 = vrot.lane.b32.xlu0 %v767, 16
  %v969 = vpop.permute.xlu0 %968
  %970 = vrot.lane.b32.xlu0 %v774, 16
  %v971 = vpop.permute.xlu0 %970
  %972 = vrot.lane.b32.xlu0 %v781, 16
  %v973 = vpop.permute.xlu0 %972
  %974 = vrot.lane.b32.xlu0 %v788, 16
  %v975 = vpop.permute.xlu0 %974
  %976 = vrot.lane.b32.xlu0 %v795, 16
  %v977 = vpop.permute.xlu0 %976
  %978 = vrot.lane.b32.xlu0 %v947, 16
  %v979 = vpop.permute.xlu0 %978
  %v980 = vrot.slane %v932, 1
  %v981 = vrot.slane %v933, 1
  %982 = vrot.lane.b32.xlu0 %v829, 20
  %v983 = vpop.permute.xlu0 %982
  %984 = vrot.lane.b32.xlu0 %v830, 20
  %v985 = vpop.permute.xlu0 %984
  %986 = vrot.lane.b32.xlu0 %v831, 20
  %v987 = vpop.permute.xlu0 %986
  %988 = vrot.lane.b32.xlu0 %v832, 20
  %v989 = vpop.permute.xlu0 %988
  %990 = vrot.lane.b32.xlu0 %v833, 20
  %v991 = vpop.permute.xlu0 %990
  %992 = vrot.lane.b32.xlu0 %v834, 20
  %v993 = vpop.permute.xlu0 %992
  %994 = vrot.lane.b32.xlu0 %v835, 20
  %v995 = vpop.permute.xlu0 %994
  %996 = vrot.lane.b32.xlu0 %v980, 20
  %v997 = vpop.permute.xlu0 %996
  %998 = vrot.lane.b32.xlu0 %v837, 20
  %v999 = vpop.permute.xlu0 %998
  %1000 = vrot.lane.b32.xlu0 %v838, 20
  %v1001 = vpop.permute.xlu0 %1000
  %1002 = vrot.lane.b32.xlu0 %v839, 20
  %v1003 = vpop.permute.xlu0 %1002
  %1004 = vrot.lane.b32.xlu0 %v840, 20
  %v1005 = vpop.permute.xlu0 %1004
  %1006 = vrot.lane.b32.xlu0 %v841, 20
  %v1007 = vpop.permute.xlu0 %1006
  %1008 = vrot.lane.b32.xlu0 %v842, 20
  %v1009 = vpop.permute.xlu0 %1008
  %1010 = vrot.lane.b32.xlu0 %v843, 20
  %v1011 = vpop.permute.xlu0 %1010
  %1012 = vrot.lane.b32.xlu0 %v981, 20
  %v1013 = vpop.permute.xlu0 %1012
  %v1016 = vunpack.c.l.b16 %v582
  %v1017 = vunpack.c.l.b16 %v602
  %v1018 = vpack.c.b16 %v1016, %v1016
  %v1019 = vpack.c.b16 %v1017, %v1017
  %1020 = vrot.lane.b32.xlu0 %v881, 24
  %v1021 = vpop.permute.xlu0 %1020
  %1022 = vrot.lane.b32.xlu0 %v882, 24
  %v1023 = vpop.permute.xlu0 %1022
  %1024 = vrot.lane.b32.xlu0 %v883, 24
  %v1025 = vpop.permute.xlu0 %1024
  %1026 = vrot.lane.b32.xlu0 %v884, 24
  %v1027 = vpop.permute.xlu0 %1026
  %1028 = vrot.lane.b32.xlu0 %v885, 24
  %v1029 = vpop.permute.xlu0 %1028
  %1030 = vrot.lane.b32.xlu0 %v886, 24
  %v1031 = vpop.permute.xlu0 %1030
  %1032 = vrot.lane.b32.xlu0 %v887, 24
  %v1033 = vpop.permute.xlu0 %1032
  %1034 = vrot.lane.b32.xlu0 %v1018, 24
  %v1035 = vpop.permute.xlu0 %1034
  %1036 = vrot.lane.b32.xlu0 %v889, 24
  %v1037 = vpop.permute.xlu0 %1036
  %1038 = vrot.lane.b32.xlu0 %v890, 24
  %v1039 = vpop.permute.xlu0 %1038
  %1040 = vrot.lane.b32.xlu0 %v891, 24
  %v1041 = vpop.permute.xlu0 %1040
  %1042 = vrot.lane.b32.xlu0 %v892, 24
  %v1043 = vpop.permute.xlu0 %1042
  %1044 = vrot.lane.b32.xlu0 %v893, 24
  %v1045 = vpop.permute.xlu0 %1044
  %1046 = vrot.lane.b32.xlu0 %v894, 24
  %v1047 = vpop.permute.xlu0 %1046
  %1048 = vrot.lane.b32.xlu0 %v895, 24
  %v1049 = vpop.permute.xlu0 %1048
  %1050 = vrot.lane.b32.xlu0 %v1019, 24
  %v1051 = vpop.permute.xlu0 %1050
  %v1054 = vunpack.c.l.b16 %v583
  %v1055 = vunpack.c.l.b16 %v603
  %v1056 = vpack.c.b16 %v1054, %v1016
  %v1057 = vpack.c.b16 %v1055, %v1017
  %v1059 = vshrl.u32 %v1056, 16
  %v1061 = vshll.u32 %v1056, 16
  %v1063 = vrot.slane %v1061, 1
  %v1064 = vor.u32 %v1059, %v1063
  %v1066 = vshrl.u32 %v1057, 16
  %v1068 = vshll.u32 %v1057, 16
  %v1070 = vrot.slane %v1068, 1
  %v1071 = vor.u32 %v1066, %v1070
  %1072 = vrot.lane.b32.xlu0 %v704, 28
  %v1073 = vpop.permute.xlu0 %1072
  %1074 = vrot.lane.b32.xlu0 %v711, 28
  %v1075 = vpop.permute.xlu0 %1074
  %1076 = vrot.lane.b32.xlu0 %v718, 28
  %v1077 = vpop.permute.xlu0 %1076
  %1078 = vrot.lane.b32.xlu0 %v725, 28
  %v1079 = vpop.permute.xlu0 %1078
  %1080 = vrot.lane.b32.xlu0 %v732, 28
  %v1081 = vpop.permute.xlu0 %1080
  %1082 = vrot.lane.b32.xlu0 %v739, 28
  %v1083 = vpop.permute.xlu0 %1082
  %1084 = vrot.lane.b32.xlu0 %v940, 28
  %v1085 = vpop.permute.xlu0 %1084
  %1086 = vrot.lane.b32.xlu0 %v1064, 28
  %v1087 = vpop.permute.xlu0 %1086
  %1088 = vrot.lane.b32.xlu0 %v760, 28
  %v1089 = vpop.permute.xlu0 %1088
  %1090 = vrot.lane.b32.xlu0 %v767, 28
  %v1091 = vpop.permute.xlu0 %1090
  %1092 = vrot.lane.b32.xlu0 %v774, 28
  %v1093 = vpop.permute.xlu0 %1092
  %1094 = vrot.lane.b32.xlu0 %v781, 28
  %v1095 = vpop.permute.xlu0 %1094
  %1096 = vrot.lane.b32.xlu0 %v788, 28
  %v1097 = vpop.permute.xlu0 %1096
  %1098 = vrot.lane.b32.xlu0 %v795, 28
  %v1099 = vpop.permute.xlu0 %1098
  %1100 = vrot.lane.b32.xlu0 %v947, 28
  %v1101 = vpop.permute.xlu0 %1100
  %1102 = vrot.lane.b32.xlu0 %v1071, 28
  %v1103 = vpop.permute.xlu0 %1102
  %v1104 = vrot.slane %v1056, 1
  %v1105 = vrot.slane %v1057, 1
  %1106 = vrot.lane.b32.xlu0 %v830, 32
  %v1107 = vpop.permute.xlu0 %1106
  %1108 = vrot.lane.b32.xlu0 %v831, 32
  %v1109 = vpop.permute.xlu0 %1108
  %1110 = vrot.lane.b32.xlu0 %v832, 32
  %v1111 = vpop.permute.xlu0 %1110
  %1112 = vrot.lane.b32.xlu0 %v833, 32
  %v1113 = vpop.permute.xlu0 %1112
  %1114 = vrot.lane.b32.xlu0 %v834, 32
  %v1115 = vpop.permute.xlu0 %1114
  %1116 = vrot.lane.b32.xlu0 %v835, 32
  %v1117 = vpop.permute.xlu0 %1116
  %1118 = vrot.lane.b32.xlu0 %v980, 32
  %v1119 = vpop.permute.xlu0 %1118
  %1120 = vrot.lane.b32.xlu0 %v1104, 32
  %v1121 = vpop.permute.xlu0 %1120
  %1122 = vrot.lane.b32.xlu0 %v838, 32
  %v1123 = vpop.permute.xlu0 %1122
  %1124 = vrot.lane.b32.xlu0 %v839, 32
  %v1125 = vpop.permute.xlu0 %1124
  %1126 = vrot.lane.b32.xlu0 %v840, 32
  %v1127 = vpop.permute.xlu0 %1126
  %1128 = vrot.lane.b32.xlu0 %v841, 32
  %v1129 = vpop.permute.xlu0 %1128
  %1130 = vrot.lane.b32.xlu0 %v842, 32
  %v1131 = vpop.permute.xlu0 %1130
  %1132 = vrot.lane.b32.xlu0 %v843, 32
  %v1133 = vpop.permute.xlu0 %1132
  %1134 = vrot.lane.b32.xlu0 %v981, 32
  %v1135 = vpop.permute.xlu0 %1134
  %1136 = vrot.lane.b32.xlu0 %v1105, 32
  %v1137 = vpop.permute.xlu0 %1136
  %vm1138 = vcmask 31744
  %v1141 = vsel %vm1138, %v564, %v797
  %v1144 = vsel %vm1138, %v566, %v799
  %v1147 = vsel %vm1138, %v568, %v801
  %v1150 = vsel %vm1138, %v570, %v803
  %v1153 = vsel %vm1138, %v572, %v805
  %v1156 = vsel %vm1138, %v574, %v807
  %v1159 = vsel %vm1138, %v576, %v809
  %v1162 = vsel %vm1138, %v578, %v811
  %v1165 = vsel %vm1138, %v584, %v813
  %v1168 = vsel %vm1138, %v586, %v815
  %v1171 = vsel %vm1138, %v588, %v817
  %v1174 = vsel %vm1138, %v590, %v819
  %v1177 = vsel %vm1138, %v592, %v821
  %v1180 = vsel %vm1138, %v594, %v823
  %v1183 = vsel %vm1138, %v596, %v825
  %v1186 = vsel %vm1138, %v598, %v827
  %vm1187 = vcmask 64512
  %v1189 = vsel %vm1187, %v1141, %v845
  %v1191 = vsel %vm1187, %v1144, %v847
  %v1193 = vsel %vm1187, %v1147, %v849
  %v1195 = vsel %vm1187, %v1150, %v851
  %v1197 = vsel %vm1187, %v1153, %v853
  %v1199 = vsel %vm1187, %v1156, %v855
  %v1201 = vsel %vm1187, %v1159, %v857
  %v1203 = vsel %vm1187, %v1162, %v859
  %v1205 = vsel %vm1187, %v1165, %v861
  %v1207 = vsel %vm1187, %v1168, %v863
  %v1209 = vsel %vm1187, %v1171, %v865
  %v1211 = vsel %vm1187, %v1174, %v867
  %v1213 = vsel %vm1187, %v1177, %v869
  %v1215 = vsel %vm1187, %v1180, %v871
  %v1217 = vsel %vm1187, %v1183, %v873
  %v1219 = vsel %vm1187, %v1186, %v875
  %vm1220 = vcmask 97280
  %v1222 = vsel %vm1220, %v1189, %v897
  %v1224 = vsel %vm1220, %v1191, %v899
  %v1226 = vsel %vm1220, %v1193, %v901
  %v1228 = vsel %vm1220, %v1195, %v903
  %v1230 = vsel %vm1220, %v1197, %v905
  %v1232 = vsel %vm1220, %v1199, %v907
  %v1234 = vsel %vm1220, %v1201, %v909
  %v1236 = vsel %vm1220, %v1203, %v911
  %v1238 = vsel %vm1220, %v1205, %v913
  %v1240 = vsel %vm1220, %v1207, %v915
  %v1242 = vsel %vm1220, %v1209, %v917
  %v1244 = vsel %vm1220, %v1211, %v919
  %v1246 = vsel %vm1220, %v1213, %v921
  %v1248 = vsel %vm1220, %v1215, %v923
  %v1250 = vsel %vm1220, %v1217, %v925
  %v1252 = vsel %vm1220, %v1219, %v927
  %vm1253 = vcmask 130048
  %v1255 = vsel %vm1253, %v1222, %v949
  %v1257 = vsel %vm1253, %v1224, %v951
  %v1259 = vsel %vm1253, %v1226, %v953
  %v1261 = vsel %vm1253, %v1228, %v955
  %v1263 = vsel %vm1253, %v1230, %v957
  %v1265 = vsel %vm1253, %v1232, %v959
  %v1267 = vsel %vm1253, %v1234, %v961
  %v1269 = vsel %vm1253, %v1236, %v963
  %v1271 = vsel %vm1253, %v1238, %v965
  %v1273 = vsel %vm1253, %v1240, %v967
  %v1275 = vsel %vm1253, %v1242, %v969
  %v1277 = vsel %vm1253, %v1244, %v971
  %v1279 = vsel %vm1253, %v1246, %v973
  %v1281 = vsel %vm1253, %v1248, %v975
  %v1283 = vsel %vm1253, %v1250, %v977
  %v1285 = vsel %vm1253, %v1252, %v979
  %vm1286 = vcmask 162816
  %v1288 = vsel %vm1286, %v1255, %v983
  %v1290 = vsel %vm1286, %v1257, %v985
  %v1292 = vsel %vm1286, %v1259, %v987
  %v1294 = vsel %vm1286, %v1261, %v989
  %v1296 = vsel %vm1286, %v1263, %v991
  %v1298 = vsel %vm1286, %v1265, %v993
  %v1300 = vsel %vm1286, %v1267, %v995
  %v1302 = vsel %vm1286, %v1269, %v997
  %v1304 = vsel %vm1286, %v1271, %v999
  %v1306 = vsel %vm1286, %v1273, %v1001
  %v1308 = vsel %vm1286, %v1275, %v1003
  %v1310 = vsel %vm1286, %v1277, %v1005
  %v1312 = vsel %vm1286, %v1279, %v1007
  %v1314 = vsel %vm1286, %v1281, %v1009
  %v1316 = vsel %vm1286, %v1283, %v1011
  %v1318 = vsel %vm1286, %v1285, %v1013
  %vm1319 = vcmask 195584
  %v1321 = vsel %vm1319, %v1288, %v1021
  %v1323 = vsel %vm1319, %v1290, %v1023
  %v1325 = vsel %vm1319, %v1292, %v1025
  %v1327 = vsel %vm1319, %v1294, %v1027
  %v1329 = vsel %vm1319, %v1296, %v1029
  %v1331 = vsel %vm1319, %v1298, %v1031
  %v1333 = vsel %vm1319, %v1300, %v1033
  %v1335 = vsel %vm1319, %v1302, %v1035
  %v1337 = vsel %vm1319, %v1304, %v1037
  %v1339 = vsel %vm1319, %v1306, %v1039
  %v1341 = vsel %vm1319, %v1308, %v1041
  %v1343 = vsel %vm1319, %v1310, %v1043
  %v1345 = vsel %vm1319, %v1312, %v1045
  %v1347 = vsel %vm1319, %v1314, %v1047
  %v1349 = vsel %vm1319, %v1316, %v1049
  %v1351 = vsel %vm1319, %v1318, %v1051
  %vm1352 = vcmask 228352
  %v1354 = vsel %vm1352, %v1321, %v1073
  %v1356 = vsel %vm1352, %v1323, %v1075
  %v1358 = vsel %vm1352, %v1325, %v1077
  %v1360 = vsel %vm1352, %v1327, %v1079
  %v1362 = vsel %vm1352, %v1329, %v1081
  %v1364 = vsel %vm1352, %v1331, %v1083
  %v1366 = vsel %vm1352, %v1333, %v1085
  %v1368 = vsel %vm1352, %v1335, %v1087
  %v1370 = vsel %vm1352, %v1337, %v1089
  %v1372 = vsel %vm1352, %v1339, %v1091
  %v1374 = vsel %vm1352, %v1341, %v1093
  %v1376 = vsel %vm1352, %v1343, %v1095
  %v1378 = vsel %vm1352, %v1345, %v1097
  %v1380 = vsel %vm1352, %v1347, %v1099
  %v1382 = vsel %vm1352, %v1349, %v1101
  %v1384 = vsel %vm1352, %v1351, %v1103
  %vm1385 = vcmask 261120
  %v1387 = vsel %vm1385, %v1354, %v1107
  %v1389 = vsel %vm1385, %v1356, %v1109
  %v1391 = vsel %vm1385, %v1358, %v1111
  %v1393 = vsel %vm1385, %v1360, %v1113
  %v1395 = vsel %vm1385, %v1362, %v1115
  %v1397 = vsel %vm1385, %v1364, %v1117
  %v1399 = vsel %vm1385, %v1366, %v1119
  %v1401 = vsel %vm1385, %v1368, %v1121
  %v1403 = vsel %vm1385, %v1370, %v1123
  %v1405 = vsel %vm1385, %v1372, %v1125
  %v1407 = vsel %vm1385, %v1374, %v1127
  %v1409 = vsel %vm1385, %v1376, %v1129
  %v1411 = vsel %vm1385, %v1378, %v1131
  %v1413 = vsel %vm1385, %v1380, %v1133
  %v1415 = vsel %vm1385, %v1382, %v1135
  %v1417 = vsel %vm1385, %v1384, %v1137
  %v1418 = vld [vmem:[%s1] sm:$0xf]
  %v1419 = vld [vmem:[%s2] sm:$0xff]
  %1421 = vset.pattern.permute.xlu0 0
  %1422 = vperm.xlu0 %1421, %v1419
  %v1423 = vpop.permute.xlu0 %1422
  %v1441 = vunpack.c.l.b16 %v1387
  %v1442 = vunpack.c.l.b16 %v1389
  %v1443 = vunpack.c.l.b16 %v1391
  %v1444 = vunpack.c.l.b16 %v1393
  %v1445 = vunpack.c.l.b16 %v1395
  %v1446 = vunpack.c.l.b16 %v1397
  %v1447 = vunpack.c.l.b16 %v1399
  %v1448 = vunpack.c.l.b16 %v1401
  %v1449 = vunpack.c.l.b16 %v1403
  %v1450 = vunpack.c.l.b16 %v1405
  %v1451 = vunpack.c.l.b16 %v1407
  %v1452 = vunpack.c.l.b16 %v1409
  %v1453 = vunpack.c.l.b16 %v1411
  %v1454 = vunpack.c.l.b16 %v1413
  %v1455 = vunpack.c.l.b16 %v1415
  %v1456 = vunpack.c.l.b16 %v1417
  %v1457 = vpack.c.b16 %v1442, %v1441
  %v1458 = vpack.c.b16 %v1444, %v1443
  %v1459 = vpack.c.b16 %v1446, %v1445
  %v1460 = vpack.c.b16 %v1448, %v1447
  %v1461 = vpack.c.b16 %v1450, %v1449
  %v1462 = vpack.c.b16 %v1452, %v1451
  %v1463 = vpack.c.b16 %v1454, %v1453
  %v1464 = vpack.c.b16 %v1456, %v1455
  %vm1465 = vcmask 293888
  %v1467 = vsel %vm1465, %v1418, 0
  %v1470 = vsel %vm1465, %v1457, 0
  %v1473 = vsel %vm1465, %v1458, 0
  %v1476 = vsel %vm1465, %v1459, 0
  %v1479 = vsel %vm1465, %v1460, 0
  %v1482 = vsel %vm1465, %v1461, 0
  %v1485 = vsel %vm1465, %v1462, 0
  %v1488 = vsel %vm1465, %v1463, 0
  %v1491 = vsel %vm1465, %v1464, 0
  %1493 = vmatpush.bf16.xpose.msra.mxu0 %v1491
  %1494 = vmatpush.bf16.xpose.msra.mxu0 %v1488
  %1495 = vmatpush.bf16.xpose.msra.mxu0 %v1485
  %1496 = vmatpush.bf16.xpose.msra.mxu0 %v1482
  %1497 = vmatpush.bf16.xpose.msra.mxu0 %v1479
  %1498 = vmatpush.bf16.xpose.msra.mxu0 %v1476
  %1499 = vmatpush.bf16.xpose.msra.mxu0 %v1473
  %1500 = vmatpush.bf16.xpose.msra.mxu0 %v1470
  %1501 = vmatmul.bf16.gmra.mxu0 %v1467
  %v1502 = vpop.f32.mrf.mxu0
  %v1503 = vadd.f32 %v1423, %v1502
  %v1504 = vpop.f32.mrf.mxu0
  %1505 = vdwg.mxu0
  %vm1506 = vcmask 523264
  %1507 = vst.msk [vmem:[%s3] sm:$0xff] %vm1506, %v1503
  %1509 = vrot.lane.b32.xlu0 %v1503, 64
  %v1510 = vpop.permute.xlu0 %1509
  %s1512 = scalar_lea.vmem %s3, 8
  %1513 = vst.msk [vmem:[%s1512] sm:$0xff] %vm1506, %v1510
  // Predicated region
  $region14: #{mean_pool_conv.1} parent=0 // pred_check
    _
  $region15: #{mean_pool_conv.1} parent=0 // pred_check_branch
    %1515 = sbr.rel (0) target = $region17
  $region16: #{mean_pool_conv.1} parent=0 // pred_region
    _
  $region17: #{mean_pool_conv.1} parent=0 // pred_fallthru
    _
  // Predicated region
  $region18: #{mean_pool_conv.1} parent=0 // pred_check
    _
  $region19: #{mean_pool_conv.1} parent=0 // pred_check_branch
    %1517 = sbr.rel (0) target = $region21
  $region20: #{mean_pool_conv.1} parent=0 // pred_region
    _
  $region21: #{mean_pool_conv.1} parent=0 // pred_fallthru
    _

</llo_original>
